<compile_context>
chip_gen: v7x
topology: tpu7x:2x2x1
jax: 0.10.0
libtpu: 0.0.40
codegen_flags: <defaults>
</compile_context>

<pallas_src>
import numpy as np
import jax
import jax.numpy as jnp
from jax import lax
from jax.experimental import pallas as pl
from jax.experimental.pallas import tpu as pltpu

# --- logical (module) sizes ---------------------------------------------------
N_USERS  = 16          # multiple of 8 -> the user/item split is a free sublane view
N_ITEMS  = 32
EMB      = 32
N_LAYERS = 2
N_TOTAL  = N_USERS + N_ITEMS        # 48 graph nodes (no node-axis padding)

# --- padded (at-rest) sizes ---------------------------------------------------
EMB_PAD  = 128         # embedding lane dim padded once, at parameter construction

# dot_general dims: contract the last axis of both operands (A @ B^T, no transpose)
_DN_NT = (((1,), (1,)), ((), ()))


# --- Pallas kernel ------------------------------------------------------------
def lr_lightgcn_kernel(adj_ref, ego_ref, user_out_ref, item_out_ref, resd_ref):
    ego = ego_ref[...]                      # [N_TOTAL, EMB_PAD] f32

    # resd_emb = user_emb @ item_emb^T -- contraction straight on the MXU.
    # Padded EMB columns are zero, so they contribute nothing.
    resd = lax.dot_general(ego[:N_USERS, :], ego[N_USERS:, :], _DN_NT,
                           preferred_element_type=jnp.float32)

    running = ego       # current propagated embedding
    sum_emb = ego       # running sum over embeddings_list (for the layer means)

    # n_layers is small & static -> unrolled Python loop.
    for layer in range(N_LAYERS):
        # all_embeddings = A_hat @ all_embeddings  (dense MXU matmul, f32 acc).
        # adj_ref is re-indexed at each use: no long-lived multi-vreg adj value.
        running = jnp.dot(adj_ref[...], running, preferred_element_type=jnp.float32)
        sum_emb = sum_emb + running

        # mean over (layer + 2) stacked embeddings folded into a scalar scale
        # of the dot result: (s/(l+2)) @ (s/(l+2))^T == (s @ s^T) * (1/(l+2))^2.
        inv = 1.0 / float(layer + 2)
        resd = resd + (inv * inv) * lax.dot_general(
            sum_emb[:N_USERS, :], sum_emb[N_USERS:, :], _DN_NT,
            preferred_element_type=jnp.float32)

    # Final mean scale fused into the stores (no mean_final temporary).
    inv_final = 1.0 / float(N_LAYERS + 1)
    user_out_ref[...] = sum_emb[:N_USERS, :] * inv_final   # [U,  128] lane-dense
    item_out_ref[...] = sum_emb[N_USERS:, :] * inv_final   # [I,  128] lane-dense
    resd_ref[...] = resd                                   # [U,   32] small masked store


# --- forward wrapper (no per-call padding or slicing) --------------------------
def _make_forward():
    # Advisory cost hint for XLA's scheduler around the tiny custom call.
    flops = (2 * N_LAYERS * N_TOTAL * N_TOTAL * EMB_PAD            # A_hat @ E, per layer
             + 2 * (N_LAYERS + 1) * N_USERS * N_ITEMS * EMB_PAD)   # resd dots
    bytes_accessed = 4 * (N_TOTAL * N_TOTAL               # adj in
                          + N_TOTAL * EMB_PAD             # ego in
                          + N_USERS * EMB_PAD             # user out
                          + N_ITEMS * EMB_PAD             # item out
                          + N_USERS * N_ITEMS)            # resd out

    call = pl.pallas_call(
        lr_lightgcn_kernel,
        out_shape=(
            jax.ShapeDtypeStruct((N_USERS, EMB_PAD), jnp.float32),
            jax.ShapeDtypeStruct((N_ITEMS, EMB_PAD), jnp.float32),
            jax.ShapeDtypeStruct((N_USERS, N_ITEMS), jnp.float32),
        ),
        in_specs=[
            pl.BlockSpec(memory_space=pltpu.MemorySpace.VMEM),
            pl.BlockSpec(memory_space=pltpu.MemorySpace.VMEM),
        ],
        out_specs=(
            pl.BlockSpec(memory_space=pltpu.MemorySpace.VMEM),
            pl.BlockSpec(memory_space=pltpu.MemorySpace.VMEM),
            pl.BlockSpec(memory_space=pltpu.MemorySpace.VMEM),
        ),
        cost_estimate=pl.CostEstimate(flops=flops, transcendentals=0,
                                      bytes_accessed=bytes_accessed),
        compiler_params=pltpu.CompilerParams(vmem_limit_bytes=4 * 1024 * 1024),
    )

    @jax.jit
    def forward(adj, ego_pad):
        # adj: [N_TOTAL, N_TOTAL] dense normalized adjacency (static, pre-built)
        # ego_pad: [N_TOTAL, EMB_PAD] embeddings stored padded at rest
        return call(adj, ego_pad)

    return forward


lr_lightgcn_forward = _make_forward()


# --- parameter / adjacency construction (one-time glue, plain JAX/numpy) ------
def xavier_uniform(key, shape):
    fan_in, fan_out = shape[0], shape[1]
    bound = np.sqrt(6.0 / (fan_in + fan_out))
    return jax.random.uniform(key, shape, jnp.float32, -bound, bound)


def build_norm_adj(interactions):
    # interactions: [n_users, n_items] binary float32  ->  D^-0.5 A D^-0.5 (dense)
    n_users, n_items = interactions.shape
    n = n_users + n_items
    A = jnp.zeros((n, n), jnp.float32)
    A = A.at[:n_users, n_users:].set(interactions)
    A = A.at[n_users:, :n_users].set(interactions.T)
    deg = (A > 0).astype(jnp.float32).sum(axis=1) + 1e-7
    d_inv_sqrt = jnp.power(deg, -0.5)
    return d_inv_sqrt[:, None] * A * d_inv_sqrt[None, :]


def build_padded_ego(user_emb, item_emb):
    """One-time 'at rest' padding of the embedding table to the 128-wide lane dim.
    Padded columns must stay zero (preserved exactly by the linear propagation)."""
    ego_pad = jnp.zeros((N_TOTAL, EMB_PAD), jnp.float32)
    ego_pad = ego_pad.at[:N_USERS, :EMB].set(user_emb)
    ego_pad = ego_pad.at[N_USERS:, :EMB].set(item_emb)
    return ego_pad


def reference_forward(adj, user_emb, item_emb):
    # float64 numpy reference of the PyTorch forward() semantics
    adj = np.asarray(adj, np.float64)
    ue = np.asarray(user_emb, np.float64)
    ie = np.asarray(item_emb, np.float64)
    ego = np.concatenate([ue, ie], axis=0)
    resd = ue @ ie.T
    emb_list = [ego]
    all_emb = ego
    for _ in range(N_LAYERS):
        all_emb = adj @ all_emb
        emb_list.append(all_emb)
        mean_emb = np.mean(np.stack(emb_list, axis=1), axis=1)
        resd = resd + mean_emb[:N_USERS] @ mean_emb[N_USERS:].T
    final = np.mean(np.stack(emb_list, axis=1), axis=1)
    return final[:N_USERS], final[N_USERS:], resd


if __name__ == "__main__":
    key = jax.random.PRNGKey(0)
    k_u, k_i, k_r = jax.random.split(key, 3)

    # deterministic "xavier_uniform_" embedding tables (logical shapes)
    user_emb = xavier_uniform(k_u, (N_USERS, EMB))
    item_emb = xavier_uniform(k_i, (N_ITEMS, EMB))

    # one-time construction: padded-at-rest embedding table + dense normalized adjacency
    ego_pad = build_padded_ego(user_emb, item_emb)                          # [48, 128]
    interactions = jax.random.bernoulli(k_r, 0.2, (N_USERS, N_ITEMS)).astype(jnp.float32)
    adj = build_norm_adj(interactions)                                      # [48, 48]

    # fused forward pass (single pallas_call, no per-call padding/slicing)
    user_pad, item_pad, resd = lr_lightgcn_forward(adj, ego_pad)
    jax.block_until_ready((user_pad, item_pad, resd))

    # slice back to logical EMB width once, outside the forward, for verification
    user_all = np.asarray(user_pad)[:, :EMB]
    item_all = np.asarray(item_pad)[:, :EMB]
    resd_np  = np.asarray(resd)

    ru, ri, rr = reference_forward(adj, user_emb, item_emb)
    np.testing.assert_allclose(user_all, ru, rtol=1e-4, atol=1e-5)
    np.testing.assert_allclose(item_all, ri, rtol=1e-4, atol=1e-5)
    np.testing.assert_allclose(resd_np,  rr, rtol=1e-4, atol=1e-5)

    # padded EMB columns must remain exactly zero (padding-preservation invariant)
    assert not np.any(np.asarray(user_pad)[:, EMB:])
    assert not np.any(np.asarray(item_pad)[:, EMB:])

    print("KERNEL_OK")
</pallas_src>

<mosaic_0001>
module attributes {stable_mosaic.version = 11 : i64} {
  func.func @lr_lightgcn_kernel(%arg0: memref<48x48xf32, #tpu.memory_space<vmem>>, %arg1: memref<48x128xf32, #tpu.memory_space<vmem>>, %arg2: memref<16x128xf32, #tpu.memory_space<vmem>>, %arg3: memref<32x128xf32, #tpu.memory_space<vmem>>, %arg4: memref<16x32xf32, #tpu.memory_space<vmem>>) attributes {dimension_semantics = [], scalar_prefetch = 0 : i64, scratch_operands = 0 : i64, tpu.core_type = #tpu.core_type<tc>} {
    %c0 = arith.constant 0 : index
    %c0_0 = arith.constant 0 : index
    %0 = vector.load %arg1[%c0, %c0_0] : memref<48x128xf32, #tpu.memory_space<vmem>>, vector<48x128xf32>
    %1 = vector.extract_strided_slice %0 {offsets = [0, 0], sizes = [16, 128], strides = [1, 1]} : vector<48x128xf32> to vector<16x128xf32>
    %2 = vector.extract_strided_slice %0 {offsets = [16, 0], sizes = [32, 128], strides = [1, 1]} : vector<48x128xf32> to vector<32x128xf32>
    %cst = arith.constant dense<0.000000e+00> : vector<16x32xf32>
    %3 = tpu.matmul %1, %2, %cst {dimension_numbers = #tpu.dot_dimension_numbers<[1], [1], [0], [0], [0, 0, 1, 0], [], []>} : vector<16x128xf32>, vector<32x128xf32>, vector<16x32xf32> -> vector<16x32xf32>
    %c0_1 = arith.constant 0 : index
    %c0_2 = arith.constant 0 : index
    %4 = vector.load %arg0[%c0_1, %c0_2] : memref<48x48xf32, #tpu.memory_space<vmem>>, vector<48x48xf32>
    %cst_3 = arith.constant dense<0.000000e+00> : vector<48x128xf32>
    %5 = tpu.matmul %4, %0, %cst_3 {dimension_numbers = #tpu.dot_dimension_numbers<[1], [0], [0], [1], [0, 0, 1, 1], [], []>} : vector<48x48xf32>, vector<48x128xf32>, vector<48x128xf32> -> vector<48x128xf32>
    %6 = arith.addf %0, %5 : vector<48x128xf32>
    %7 = vector.extract_strided_slice %6 {offsets = [0, 0], sizes = [16, 128], strides = [1, 1]} : vector<48x128xf32> to vector<16x128xf32>
    %8 = vector.extract_strided_slice %6 {offsets = [16, 0], sizes = [32, 128], strides = [1, 1]} : vector<48x128xf32> to vector<32x128xf32>
    %cst_4 = arith.constant dense<0.000000e+00> : vector<16x32xf32>
    %9 = tpu.matmul %7, %8, %cst_4 {dimension_numbers = #tpu.dot_dimension_numbers<[1], [1], [0], [0], [0, 0, 1, 0], [], []>} : vector<16x128xf32>, vector<32x128xf32>, vector<16x32xf32> -> vector<16x32xf32>
    %cst_5 = arith.constant 2.500000e-01 : f32
    %10 = vector.broadcast %cst_5 : f32 to vector<16x32xf32>
    %11 = arith.mulf %10, %9 : vector<16x32xf32>
    %12 = arith.addf %3, %11 : vector<16x32xf32>
    %c0_6 = arith.constant 0 : index
    %c0_7 = arith.constant 0 : index
    %13 = vector.load %arg0[%c0_6, %c0_7] : memref<48x48xf32, #tpu.memory_space<vmem>>, vector<48x48xf32>
    %cst_8 = arith.constant dense<0.000000e+00> : vector<48x128xf32>
    %14 = tpu.matmul %13, %5, %cst_8 {dimension_numbers = #tpu.dot_dimension_numbers<[1], [0], [0], [1], [0, 0, 1, 1], [], []>} : vector<48x48xf32>, vector<48x128xf32>, vector<48x128xf32> -> vector<48x128xf32>
    %15 = arith.addf %6, %14 : vector<48x128xf32>
    %16 = vector.extract_strided_slice %15 {offsets = [0, 0], sizes = [16, 128], strides = [1, 1]} : vector<48x128xf32> to vector<16x128xf32>
    %17 = vector.extract_strided_slice %15 {offsets = [16, 0], sizes = [32, 128], strides = [1, 1]} : vector<48x128xf32> to vector<32x128xf32>
    %cst_9 = arith.constant dense<0.000000e+00> : vector<16x32xf32>
    %18 = tpu.matmul %16, %17, %cst_9 {dimension_numbers = #tpu.dot_dimension_numbers<[1], [1], [0], [0], [0, 0, 1, 0], [], []>} : vector<16x128xf32>, vector<32x128xf32>, vector<16x32xf32> -> vector<16x32xf32>
    %cst_10 = arith.constant 0.111111112 : f32
    %19 = vector.broadcast %cst_10 : f32 to vector<16x32xf32>
    %20 = arith.mulf %19, %18 : vector<16x32xf32>
    %21 = arith.addf %12, %20 : vector<16x32xf32>
    %22 = vector.extract_strided_slice %15 {offsets = [0, 0], sizes = [16, 128], strides = [1, 1]} : vector<48x128xf32> to vector<16x128xf32>
    %cst_11 = arith.constant 0.333333343 : f32
    %23 = vector.broadcast %cst_11 : f32 to vector<16x128xf32>
    %24 = arith.mulf %22, %23 : vector<16x128xf32>
    %c0_12 = arith.constant 0 : index
    %c0_13 = arith.constant 0 : index
    %25 = vector.load %arg2[%c0_12, %c0_13] : memref<16x128xf32, #tpu.memory_space<vmem>>, vector<16x128xf32>
    tpu.vector_store %arg2[%c0_12, %c0_13], %24 {strides = array<i32>} : memref<16x128xf32, #tpu.memory_space<vmem>>, vector<16x128xf32>,
    %26 = vector.extract_strided_slice %15 {offsets = [16, 0], sizes = [32, 128], strides = [1, 1]} : vector<48x128xf32> to vector<32x128xf32>
    %cst_14 = arith.constant 0.333333343 : f32
    %27 = vector.broadcast %cst_14 : f32 to vector<32x128xf32>
    %28 = arith.mulf %26, %27 : vector<32x128xf32>
    %c0_15 = arith.constant 0 : index
    %c0_16 = arith.constant 0 : index
    %29 = vector.load %arg3[%c0_15, %c0_16] : memref<32x128xf32, #tpu.memory_space<vmem>>, vector<32x128xf32>
    tpu.vector_store %arg3[%c0_15, %c0_16], %28 {strides = array<i32>} : memref<32x128xf32, #tpu.memory_space<vmem>>, vector<32x128xf32>,
    %c0_17 = arith.constant 0 : index
    %c0_18 = arith.constant 0 : index
    %30 = vector.load %arg4[%c0_17, %c0_18] : memref<16x32xf32, #tpu.memory_space<vmem>>, vector<16x32xf32>
    tpu.vector_store %arg4[%c0_17, %c0_18], %21 {strides = array<i32>} : memref<16x32xf32, #tpu.memory_space<vmem>>, vector<16x32xf32>,
    return
  }
}

</mosaic_0001>

<llo_original>
// kernel: forward.1
$region0: #{forward.1}
  #allocation0 [shape = 'u32[]', space=smem, size = 0x4, offset = 0x4, fixed_abs, tag = 'smem constant byte address 0x4 - core index']
  #allocation1 [shape = 'u32[144,128]{1,0:T(1,128)}', space=vmem, size = 0x12000, scoped, tag = 'internal scratch']
  %s0 = inlined_call_operand.hbm [shape: f32[48,48], index: 0, kind: input, shape index: {}]
  %s1 = inlined_call_operand.hbm [shape: f32[48,128], index: 1, kind: input, shape index: {}]
  %s2 = inlined_call_operand.hbm [shape: f32[16,128], index: 2, kind: output, shape index: {0}]
  %s3 = inlined_call_operand.hbm [shape: f32[32,128], index: 3, kind: output, shape index: {1}]
  %s4 = inlined_call_operand.hbm [shape: f32[16,32], index: 4, kind: output, shape index: {2}]
  %5 = xla_tuple %s2, %s3, %s4
  %s6 = sld [smem:[#allocation0]]
  $region42: #{forward.1} parent=0
    _
  %s8 = ssub.s32 1, %s6
  %s9 = scalar_select 0, %s8, %s6
  $region1: #{forward.1} parent=0
    #allocation2 [shape = 'u8[24576]{0}', space=vmem, size = 0x6000, scoped, tag = 'input window, operand 0, single buffered']
    #allocation3 [shape = 's32[1]{0}', space=sflag, size = 0x4, scoped, tag = 'scoped memory for forward.1']
    #allocation4 [shape = 's32[1]{0}', space=sflag, size = 0x4, scoped, tag = 'scoped memory for forward.1']
    #allocation5 [shape = 'u8[24576]{0}', space=vmem, size = 0x6000, scoped, tag = 'input window, operand 1, single buffered']
    #allocation6 [shape = 's32[1]{0}', space=sflag, size = 0x4, scoped, tag = 'scoped memory for forward.1']
    #allocation7 [shape = 'u8[8192]{0}', space=vmem, size = 0x2000, scoped, tag = 'output window, operand 0, single buffered']
    #allocation8 [shape = 'u8[16384]{0}', space=vmem, size = 0x4000, scoped, tag = 'output window, operand 1, single buffered']
    #allocation9 [shape = 's32[1]{0}', space=sflag, size = 0x4, scoped, tag = 'scoped memory for forward.1']
    #allocation10 [shape = 'u8[8192]{0}', space=vmem, size = 0x2000, scoped, tag = 'output window, operand 2, single buffered']
    %10 = vsyncpa [#allocation3], 0
    %11 = vsyncpa [#allocation6], 0
    %12 = vsyncpa [#allocation4], 0
    %13 = vsyncpa [#allocation9], 0
    // Predicated region
    $region2: #{forward.1} parent=1 // pred_check
      _
    $region3: #{forward.1} parent=1 // pred_check_branch
      %15 = sbr.rel (0) target = $region5
    $region4: #{forward.1} parent=1 // pred_region
      %s17 = ssub.s32 768, 768
      %18 = vsyncadd [#allocation3], %s17
      %s19 = sshll.u32 [#allocation2], 4
      %s20 = int_to_ptr.vmem [resolvable:$true] %s19
      %25 = dma.hbm_to_vmem [thread:$0]  %s0, 768, %s20, [#allocation3], 128, 128, 8
    $region5: #{forward.1} parent=1 // pred_fallthru
      _
    // Predicated region
    $region6: #{forward.1} parent=1 // pred_check
      _
    $region7: #{forward.1} parent=1 // pred_check_branch
      %27 = sbr.rel (0) target = $region9
    $region8: #{forward.1} parent=1 // pred_region
      %s29 = ssub.s32 768, 768
      %30 = vsyncadd [#allocation6], %s29
      %s31 = sshll.u32 [#allocation5], 4
      %s32 = int_to_ptr.vmem [resolvable:$true] %s31
      %37 = dma.hbm_to_vmem [thread:$0]  %s1, 768, %s32, [#allocation6], 128, 128, 8
    $region9: #{forward.1} parent=1 // pred_fallthru
      _
    // Predicated region
    $region10: #{forward.1} parent=1 // pred_check
      _
    $region11: #{forward.1} parent=1 // pred_check_branch
      %39 = sbr.rel (0) target = $region13
    $region12: #{forward.1} parent=1 // pred_region
      %40 = dma.done [#allocation3], 768
    $region13: #{forward.1} parent=1 // pred_fallthru
      _
    // Predicated region
    $region14: #{forward.1} parent=1 // pred_check
      _
    $region15: #{forward.1} parent=1 // pred_check_branch
      %42 = sbr.rel (0) target = $region17
    $region16: #{forward.1} parent=1 // pred_region
      %43 = dma.done [#allocation6], 768
    $region17: #{forward.1} parent=1 // pred_fallthru
      _
    %v44 = vld [vmem:[#allocation5] sm:$0xff]
    %v45 = vld [vmem:[#allocation5 + $0x8] sm:$0xff]
    %v46 = vld [vmem:[#allocation5 + $0x10] sm:$0xff]
    %v47 = vld [vmem:[#allocation5 + $0x18] sm:$0xff]
    %v48 = vld [vmem:[#allocation5 + $0x20] sm:$0xff]
    %v49 = vld [vmem:[#allocation5 + $0x28] sm:$0xff]
    %v50 = vld [vmem:[#allocation2] sm:$0xff]
    %v51 = vld [vmem:[#allocation2 + $0x8] sm:$0xff]
    %v52 = vld [vmem:[#allocation2 + $0x10] sm:$0xff]
    %v53 = vld [vmem:[#allocation2 + $0x18] sm:$0xff]
    %v54 = vld [vmem:[#allocation2 + $0x20] sm:$0xff]
    %v55 = vld [vmem:[#allocation2 + $0x28] sm:$0xff]
    %vm56 = vcmask 392192
    %v58 = vsel %vm56, %v50, 0
    %v61 = vsel %vm56, %v51, 0
    %v64 = vsel %vm56, %v52, 0
    %v67 = vsel %vm56, %v53, 0
    %v70 = vsel %vm56, %v54, 0
    %v73 = vsel %vm56, %v55, 0
    %75 = vmatprep.subr.mxu0 0.0
    %76 = vmatpush1.msra.mxu0 %v44
    %77 = vmatprep.subr.mxu0 0.0
    %78 = vmatpush1.msra.mxu0 %v45
    %79 = vmatprep.subr.mxu0 0.0
    %80 = vmatpush1.msra.mxu0 %v46
    %81 = vmatprep.subr.mxu0 0.0
    %82 = vmatpush1.msra.mxu0 %v47
    %83 = vmatprep.subr.mxu0 0.0
    %84 = vmatpush1.msra.mxu0 %v48
    %85 = vmatprep.subr.mxu0 0.0
    %86 = vmatpush1.msra.mxu0 %v49
    %87 = vmatprep.subr.mxu0 0.0
    %88 = vmatpush1.msra.mxu0 0.0
    %89 = vmatprep.subr.mxu0 0.0
    %90 = vmatpush1.msra.mxu0 0.0
    %91 = vmatprep.subr.mxu0 0.0
    %92 = vmatpush1.msra.mxu0 0.0
    %93 = vmatprep.subr.mxu0 0.0
    %94 = vmatpush1.msra.mxu0 0.0
    %95 = vmatprep.subr.mxu0 0.0
    %96 = vmatpush1.msra.mxu0 0.0
    %97 = vmatprep.subr.mxu0 0.0
    %98 = vmatpush1.msra.mxu0 0.0
    %99 = vmatprep.subr.mxu0 0.0
    %100 = vmatpush1.msra.mxu0 0.0
    %101 = vmatprep.subr.mxu0 0.0
    %102 = vmatpush1.msra.mxu0 0.0
    %103 = vmatprep.subr.mxu0 0.0
    %104 = vmatpush1.msra.mxu0 0.0
    %105 = vmatprep.subr.mxu0 0.0
    %106 = vmatpush1.msra.mxu0 0.0
    %107 = vmatprep.subr.mxu0 0.0
    %108 = vmatpush1.msra.mxu0 0.0
    %109 = vmatprep.subr.mxu0 0.0
    %110 = vmatpush1.msra.mxu0 0.0
    %111 = vmatprep.subr.mxu0 0.0
    %112 = vmatpush1.msra.mxu0 0.0
    %113 = vmatprep.subr.mxu0 0.0
    %114 = vmatpush1.msra.mxu0 0.0
    %115 = vmatprep.subr.mxu0 0.0
    %116 = vmatpush1.msra.mxu0 0.0
    %117 = vmatprep.subr.mxu0 0.0
    %118 = vmatpush1.msra.mxu0 0.0
    %119 = vmatprep.subr.mxu0 0.0
    %120 = vmatpush1.msra.mxu0 0.0
    %121 = vmatprep.subr.mxu0 0.0
    %122 = vmatpush1.msra.mxu0 0.0
    %123 = vmatprep.subr.mxu0 0.0
    %124 = vmatpush1.msra.mxu0 0.0
    %125 = vmatprep.subr.mxu0 0.0
    %126 = vmatpush1.msra.mxu0 0.0
    %127 = vmatprep.subr.mxu0 0.0
    %128 = vmatpush1.msra.mxu0 0.0
    %129 = vmatprep.subr.mxu0 0.0
    %130 = vmatpush1.msra.mxu0 0.0
    %131 = vmatprep.subr.mxu0 0.0
    %132 = vmatpush1.msra.mxu0 0.0
    %133 = vmatprep.subr.mxu0 0.0
    %134 = vmatpush1.msra.mxu0 0.0
    %135 = vmatprep.subr.mxu0 0.0
    %136 = vmatpush1.msra.mxu0 0.0
    %137 = vmatprep.subr.mxu0 0.0
    %138 = vmatpush1.msra.mxu0 0.0
    %139 = vmatprep.mubr.f32.mxu0 0.0
    %140 = vmatmul.mubr.f32.gmra.mrb[0].mxu0 %v58
    %v141 = vpop.f32.mrb[0].mxu0
    %v142 = vadd.f32 0.0, %v141
    %v143 = vpop.f32.mrb[0].mxu0
    %144 = vmatprep.mubr.f32.mxu0 0.0
    %145 = vmatmul.mubr.f32.gmra.mrb[0].mxu0 %v61
    %v146 = vpop.f32.mrb[0].mxu0
    %v147 = vadd.f32 0.0, %v146
    %v148 = vpop.f32.mrb[0].mxu0
    %149 = vmatprep.mubr.f32.mxu0 0.0
    %150 = vmatmul.mubr.f32.gmra.mrb[0].mxu0 %v64
    %v151 = vpop.f32.mrb[0].mxu0
    %v152 = vadd.f32 0.0, %v151
    %v153 = vpop.f32.mrb[0].mxu0
    %154 = vmatprep.mubr.f32.mxu0 0.0
    %155 = vmatmul.mubr.f32.gmra.mrb[0].mxu0 %v67
    %v156 = vpop.f32.mrb[0].mxu0
    %v157 = vadd.f32 0.0, %v156
    %v158 = vpop.f32.mrb[0].mxu0
    %159 = vmatprep.mubr.f32.mxu0 0.0
    %160 = vmatmul.mubr.f32.gmra.mrb[0].mxu0 %v70
    %v161 = vpop.f32.mrb[0].mxu0
    %v162 = vadd.f32 0.0, %v161
    %v163 = vpop.f32.mrb[0].mxu0
    %164 = vmatprep.mubr.f32.mxu0 0.0
    %165 = vmatmul.mubr.f32.gmra.mrb[0].mxu0 %v73
    %v166 = vpop.f32.mrb[0].mxu0
    %v167 = vadd.f32 0.0, %v166
    %v168 = vpop.f32.mrb[0].mxu0
    %169 = vdwg.mxu0
    %v170 = vadd.f32 %v44, %v142
    %v171 = vadd.f32 %v45, %v147
    %v172 = vadd.f32 %v46, %v152
    %v173 = vadd.f32 %v47, %v157
    %v174 = vadd.f32 %v48, %v162
    %v175 = vadd.f32 %v49, %v167
    %176 = vmatprep.subr.mxu0 0.0
    %177 = vmatpush1.xpose.msra.mxu0 %v172
    %178 = vmatprep.subr.mxu0 0.0
    %179 = vmatpush1.xpose.msra.mxu0 %v173
    %180 = vmatprep.subr.mxu0 0.0
    %181 = vmatpush1.xpose.msra.mxu0 %v174
    %182 = vmatprep.subr.mxu0 0.0
    %183 = vmatpush1.xpose.msra.mxu0 %v175
    %184 = vmatprep.subr.mxu0 0.0
    %185 = vmatpush1.xpose.msra.mxu0 0.0
    %186 = vmatprep.subr.mxu0 0.0
    %187 = vmatpush1.xpose.msra.mxu0 0.0
    %188 = vmatprep.subr.mxu0 0.0
    %189 = vmatpush1.xpose.msra.mxu0 0.0
    %190 = vmatprep.subr.mxu0 0.0
    %191 = vmatpush1.xpose.msra.mxu0 0.0
    %192 = vmatprep.subr.mxu0 0.0
    %193 = vmatpush1.xpose.msra.mxu0 0.0
    %194 = vmatprep.subr.mxu0 0.0
    %195 = vmatpush1.xpose.msra.mxu0 0.0
    %196 = vmatprep.subr.mxu0 0.0
    %197 = vmatpush1.xpose.msra.mxu0 0.0
    %198 = vmatprep.subr.mxu0 0.0
    %199 = vmatpush1.xpose.msra.mxu0 0.0
    %200 = vmatprep.subr.mxu0 0.0
    %201 = vmatpush1.xpose.msra.mxu0 0.0
    %202 = vmatprep.subr.mxu0 0.0
    %203 = vmatpush1.xpose.msra.mxu0 0.0
    %204 = vmatprep.subr.mxu0 0.0
    %205 = vmatpush1.xpose.msra.mxu0 0.0
    %206 = vmatprep.subr.mxu0 0.0
    %207 = vmatpush1.xpose.msra.mxu0 0.0
    %208 = vmatprep.subr.mxu0 0.0
    %209 = vmatpush1.xpose.msra.mxu0 0.0
    %210 = vmatprep.subr.mxu0 0.0
    %211 = vmatpush1.xpose.msra.mxu0 0.0
    %212 = vmatprep.subr.mxu0 0.0
    %213 = vmatpush1.xpose.msra.mxu0 0.0
    %214 = vmatprep.subr.mxu0 0.0
    %215 = vmatpush1.xpose.msra.mxu0 0.0
    %216 = vmatprep.subr.mxu0 0.0
    %217 = vmatpush1.xpose.msra.mxu0 0.0
    %218 = vmatprep.subr.mxu0 0.0
    %219 = vmatpush1.xpose.msra.mxu0 0.0
    %220 = vmatprep.subr.mxu0 0.0
    %221 = vmatpush1.xpose.msra.mxu0 0.0
    %222 = vmatprep.subr.mxu0 0.0
    %223 = vmatpush1.xpose.msra.mxu0 0.0
    %224 = vmatprep.subr.mxu0 0.0
    %225 = vmatpush1.xpose.msra.mxu0 0.0
    %226 = vmatprep.subr.mxu0 0.0
    %227 = vmatpush1.xpose.msra.mxu0 0.0
    %228 = vmatprep.subr.mxu0 0.0
    %229 = vmatpush1.xpose.msra.mxu0 0.0
    %230 = vmatprep.subr.mxu0 0.0
    %231 = vmatpush1.xpose.msra.mxu0 0.0
    %232 = vmatprep.subr.mxu0 0.0
    %233 = vmatpush1.xpose.msra.mxu0 0.0
    %234 = vmatprep.subr.mxu0 0.0
    %235 = vmatpush1.xpose.msra.mxu0 0.0
    %236 = vmatprep.subr.mxu0 0.0
    %237 = vmatpush1.xpose.msra.mxu0 0.0
    %238 = vmatprep.subr.mxu0 0.0
    %239 = vmatpush1.xpose.msra.mxu0 0.0
    %240 = vmatprep.mubr.f32.mxu0 0.0
    %241 = vmatmul.mubr.f32.gmra.mrb[0].mxu0 %v170
    %v242 = vpop.f32.mrb[0].mxu0
    %v243 = vadd.f32 0.0, %v242
    %v244 = vpop.f32.mrb[0].mxu0
    %245 = vmatprep.mubr.f32.mxu0 0.0
    %246 = vmatmul.mubr.f32.gmra.mrb[0].mxu0 %v171
    %v247 = vpop.f32.mrb[0].mxu0
    %v248 = vadd.f32 0.0, %v247
    %v249 = vpop.f32.mrb[0].mxu0
    %250 = vdwg.mxu0
    %v251 = vmul.f32 %v243, 0.25
    %v252 = vmul.f32 %v248, 0.25
    %253 = vmatprep.subr.mxu0 0.0
    %254 = vmatpush1.xpose.msra.mxu0 %v46
    %255 = vmatprep.subr.mxu0 0.0
    %256 = vmatpush1.xpose.msra.mxu0 %v47
    %257 = vmatprep.subr.mxu0 0.0
    %258 = vmatpush1.xpose.msra.mxu0 %v48
    %259 = vmatprep.subr.mxu0 0.0
    %260 = vmatpush1.xpose.msra.mxu0 %v49
    %261 = vmatprep.subr.mxu0 0.0
    %262 = vmatpush1.xpose.msra.mxu0 0.0
    %263 = vmatprep.subr.mxu0 0.0
    %264 = vmatpush1.xpose.msra.mxu0 0.0
    %265 = vmatprep.subr.mxu0 0.0
    %266 = vmatpush1.xpose.msra.mxu0 0.0
    %267 = vmatprep.subr.mxu0 0.0
    %268 = vmatpush1.xpose.msra.mxu0 0.0
    %269 = vmatprep.subr.mxu0 0.0
    %270 = vmatpush1.xpose.msra.mxu0 0.0
    %271 = vmatprep.subr.mxu0 0.0
    %272 = vmatpush1.xpose.msra.mxu0 0.0
    %273 = vmatprep.subr.mxu0 0.0
    %274 = vmatpush1.xpose.msra.mxu0 0.0
    %275 = vmatprep.subr.mxu0 0.0
    %276 = vmatpush1.xpose.msra.mxu0 0.0
    %277 = vmatprep.subr.mxu0 0.0
    %278 = vmatpush1.xpose.msra.mxu0 0.0
    %279 = vmatprep.subr.mxu0 0.0
    %280 = vmatpush1.xpose.msra.mxu0 0.0
    %281 = vmatprep.subr.mxu0 0.0
    %282 = vmatpush1.xpose.msra.mxu0 0.0
    %283 = vmatprep.subr.mxu0 0.0
    %284 = vmatpush1.xpose.msra.mxu0 0.0
    %285 = vmatprep.subr.mxu0 0.0
    %286 = vmatpush1.xpose.msra.mxu0 0.0
    %287 = vmatprep.subr.mxu0 0.0
    %288 = vmatpush1.xpose.msra.mxu0 0.0
    %289 = vmatprep.subr.mxu0 0.0
    %290 = vmatpush1.xpose.msra.mxu0 0.0
    %291 = vmatprep.subr.mxu0 0.0
    %292 = vmatpush1.xpose.msra.mxu0 0.0
    %293 = vmatprep.subr.mxu0 0.0
    %294 = vmatpush1.xpose.msra.mxu0 0.0
    %295 = vmatprep.subr.mxu0 0.0
    %296 = vmatpush1.xpose.msra.mxu0 0.0
    %297 = vmatprep.subr.mxu0 0.0
    %298 = vmatpush1.xpose.msra.mxu0 0.0
    %299 = vmatprep.subr.mxu0 0.0
    %300 = vmatpush1.xpose.msra.mxu0 0.0
    %301 = vmatprep.subr.mxu0 0.0
    %302 = vmatpush1.xpose.msra.mxu0 0.0
    %303 = vmatprep.subr.mxu0 0.0
    %304 = vmatpush1.xpose.msra.mxu0 0.0
    %305 = vmatprep.subr.mxu0 0.0
    %306 = vmatpush1.xpose.msra.mxu0 0.0
    %307 = vmatprep.subr.mxu0 0.0
    %308 = vmatpush1.xpose.msra.mxu0 0.0
    %309 = vmatprep.subr.mxu0 0.0
    %310 = vmatpush1.xpose.msra.mxu0 0.0
    %311 = vmatprep.subr.mxu0 0.0
    %312 = vmatpush1.xpose.msra.mxu0 0.0
    %313 = vmatprep.subr.mxu0 0.0
    %314 = vmatpush1.xpose.msra.mxu0 0.0
    %315 = vmatprep.subr.mxu0 0.0
    %316 = vmatpush1.xpose.msra.mxu0 0.0
    %317 = vmatprep.mubr.f32.mxu0 0.0
    %318 = vmatmul.mubr.f32.gmra.mrb[0].mxu0 %v44
    %v319 = vpop.f32.mrb[0].mxu0
    %v320 = vadd.f32 %v251, %v319
    %v321 = vpop.f32.mrb[0].mxu0
    %322 = vmatprep.mubr.f32.mxu0 0.0
    %323 = vmatmul.mubr.f32.gmra.mrb[0].mxu0 %v45
    %v324 = vpop.f32.mrb[0].mxu0
    %v325 = vadd.f32 %v252, %v324
    %v326 = vpop.f32.mrb[0].mxu0
    %327 = vdwg.mxu0
    %328 = vmatprep.subr.mxu0 0.0
    %329 = vmatpush1.msra.mxu0 %v142
    %330 = vmatprep.subr.mxu0 0.0
    %331 = vmatpush1.msra.mxu0 %v147
    %332 = vmatprep.subr.mxu0 0.0
    %333 = vmatpush1.msra.mxu0 %v152
    %334 = vmatprep.subr.mxu0 0.0
    %335 = vmatpush1.msra.mxu0 %v157
    %336 = vmatprep.subr.mxu0 0.0
    %337 = vmatpush1.msra.mxu0 %v162
    %338 = vmatprep.subr.mxu0 0.0
    %339 = vmatpush1.msra.mxu0 %v167
    %340 = vmatprep.subr.mxu0 0.0
    %341 = vmatpush1.msra.mxu0 0.0
    %342 = vmatprep.subr.mxu0 0.0
    %343 = vmatpush1.msra.mxu0 0.0
    %344 = vmatprep.subr.mxu0 0.0
    %345 = vmatpush1.msra.mxu0 0.0
    %346 = vmatprep.subr.mxu0 0.0
    %347 = vmatpush1.msra.mxu0 0.0
    %348 = vmatprep.subr.mxu0 0.0
    %349 = vmatpush1.msra.mxu0 0.0
    %350 = vmatprep.subr.mxu0 0.0
    %351 = vmatpush1.msra.mxu0 0.0
    %352 = vmatprep.subr.mxu0 0.0
    %353 = vmatpush1.msra.mxu0 0.0
    %354 = vmatprep.subr.mxu0 0.0
    %355 = vmatpush1.msra.mxu0 0.0
    %356 = vmatprep.subr.mxu0 0.0
    %357 = vmatpush1.msra.mxu0 0.0
    %358 = vmatprep.subr.mxu0 0.0
    %359 = vmatpush1.msra.mxu0 0.0
    %360 = vmatprep.subr.mxu0 0.0
    %361 = vmatpush1.msra.mxu0 0.0
    %362 = vmatprep.subr.mxu0 0.0
    %363 = vmatpush1.msra.mxu0 0.0
    %364 = vmatprep.subr.mxu0 0.0
    %365 = vmatpush1.msra.mxu0 0.0
    %366 = vmatprep.subr.mxu0 0.0
    %367 = vmatpush1.msra.mxu0 0.0
    %368 = vmatprep.subr.mxu0 0.0
    %369 = vmatpush1.msra.mxu0 0.0
    %370 = vmatprep.subr.mxu0 0.0
    %371 = vmatpush1.msra.mxu0 0.0
    %372 = vmatprep.subr.mxu0 0.0
    %373 = vmatpush1.msra.mxu0 0.0
    %374 = vmatprep.subr.mxu0 0.0
    %375 = vmatpush1.msra.mxu0 0.0
    %376 = vmatprep.subr.mxu0 0.0
    %377 = vmatpush1.msra.mxu0 0.0
    %378 = vmatprep.subr.mxu0 0.0
    %379 = vmatpush1.msra.mxu0 0.0
    %380 = vmatprep.subr.mxu0 0.0
    %381 = vmatpush1.msra.mxu0 0.0
    %382 = vmatprep.subr.mxu0 0.0
    %383 = vmatpush1.msra.mxu0 0.0
    %384 = vmatprep.subr.mxu0 0.0
    %385 = vmatpush1.msra.mxu0 0.0
    %386 = vmatprep.subr.mxu0 0.0
    %387 = vmatpush1.msra.mxu0 0.0
    %388 = vmatprep.subr.mxu0 0.0
    %389 = vmatpush1.msra.mxu0 0.0
    %390 = vmatprep.subr.mxu0 0.0
    %391 = vmatpush1.msra.mxu0 0.0
    %392 = vmatprep.mubr.f32.mxu0 0.0
    %393 = vmatmul.mubr.f32.gmra.mrb[0].mxu0 %v58
    %v394 = vpop.f32.mrb[0].mxu0
    %v395 = vadd.f32 0.0, %v394
    %v396 = vpop.f32.mrb[0].mxu0
    %397 = vmatprep.mubr.f32.mxu0 0.0
    %398 = vmatmul.mubr.f32.gmra.mrb[0].mxu0 %v61
    %v399 = vpop.f32.mrb[0].mxu0
    %v400 = vadd.f32 0.0, %v399
    %v401 = vpop.f32.mrb[0].mxu0
    %402 = vmatprep.mubr.f32.mxu0 0.0
    %403 = vmatmul.mubr.f32.gmra.mrb[0].mxu0 %v64
    %v404 = vpop.f32.mrb[0].mxu0
    %v405 = vadd.f32 0.0, %v404
    %v406 = vpop.f32.mrb[0].mxu0
    %407 = vmatprep.mubr.f32.mxu0 0.0
    %408 = vmatmul.mubr.f32.gmra.mrb[0].mxu0 %v67
    %v409 = vpop.f32.mrb[0].mxu0
    %v410 = vadd.f32 0.0, %v409
    %v411 = vpop.f32.mrb[0].mxu0
    %412 = vmatprep.mubr.f32.mxu0 0.0
    %413 = vmatmul.mubr.f32.gmra.mrb[0].mxu0 %v70
    %v414 = vpop.f32.mrb[0].mxu0
    %v415 = vadd.f32 0.0, %v414
    %v416 = vpop.f32.mrb[0].mxu0
    %417 = vmatprep.mubr.f32.mxu0 0.0
    %418 = vmatmul.mubr.f32.gmra.mrb[0].mxu0 %v73
    %v419 = vpop.f32.mrb[0].mxu0
    %v420 = vadd.f32 0.0, %v419
    %v421 = vpop.f32.mrb[0].mxu0
    %422 = vdwg.mxu0
    %v423 = vadd.f32 %v170, %v395
    %v424 = vadd.f32 %v171, %v400
    %v425 = vadd.f32 %v172, %v405
    %v426 = vadd.f32 %v173, %v410
    %v427 = vadd.f32 %v174, %v415
    %v428 = vadd.f32 %v175, %v420
    %429 = vmatprep.subr.mxu0 0.0
    %430 = vmatpush1.xpose.msra.mxu0 %v425
    %431 = vmatprep.subr.mxu0 0.0
    %432 = vmatpush1.xpose.msra.mxu0 %v426
    %433 = vmatprep.subr.mxu0 0.0
    %434 = vmatpush1.xpose.msra.mxu0 %v427
    %435 = vmatprep.subr.mxu0 0.0
    %436 = vmatpush1.xpose.msra.mxu0 %v428
    %437 = vmatprep.subr.mxu0 0.0
    %438 = vmatpush1.xpose.msra.mxu0 0.0
    %439 = vmatprep.subr.mxu0 0.0
    %440 = vmatpush1.xpose.msra.mxu0 0.0
    %441 = vmatprep.subr.mxu0 0.0
    %442 = vmatpush1.xpose.msra.mxu0 0.0
    %443 = vmatprep.subr.mxu0 0.0
    %444 = vmatpush1.xpose.msra.mxu0 0.0
    %445 = vmatprep.subr.mxu0 0.0
    %446 = vmatpush1.xpose.msra.mxu0 0.0
    %447 = vmatprep.subr.mxu0 0.0
    %448 = vmatpush1.xpose.msra.mxu0 0.0
    %449 = vmatprep.subr.mxu0 0.0
    %450 = vmatpush1.xpose.msra.mxu0 0.0
    %451 = vmatprep.subr.mxu0 0.0
    %452 = vmatpush1.xpose.msra.mxu0 0.0
    %453 = vmatprep.subr.mxu0 0.0
    %454 = vmatpush1.xpose.msra.mxu0 0.0
    %455 = vmatprep.subr.mxu0 0.0
    %456 = vmatpush1.xpose.msra.mxu0 0.0
    %457 = vmatprep.subr.mxu0 0.0
    %458 = vmatpush1.xpose.msra.mxu0 0.0
    %459 = vmatprep.subr.mxu0 0.0
    %460 = vmatpush1.xpose.msra.mxu0 0.0
    %461 = vmatprep.subr.mxu0 0.0
    %462 = vmatpush1.xpose.msra.mxu0 0.0
    %463 = vmatprep.subr.mxu0 0.0
    %464 = vmatpush1.xpose.msra.mxu0 0.0
    %465 = vmatprep.subr.mxu0 0.0
    %466 = vmatpush1.xpose.msra.mxu0 0.0
    %467 = vmatprep.subr.mxu0 0.0
    %468 = vmatpush1.xpose.msra.mxu0 0.0
    %469 = vmatprep.subr.mxu0 0.0
    %470 = vmatpush1.xpose.msra.mxu0 0.0
    %471 = vmatprep.subr.mxu0 0.0
    %472 = vmatpush1.xpose.msra.mxu0 0.0
    %473 = vmatprep.subr.mxu0 0.0
    %474 = vmatpush1.xpose.msra.mxu0 0.0
    %475 = vmatprep.subr.mxu0 0.0
    %476 = vmatpush1.xpose.msra.mxu0 0.0
    %477 = vmatprep.subr.mxu0 0.0
    %478 = vmatpush1.xpose.msra.mxu0 0.0
    %479 = vmatprep.subr.mxu0 0.0
    %480 = vmatpush1.xpose.msra.mxu0 0.0
    %481 = vmatprep.subr.mxu0 0.0
    %482 = vmatpush1.xpose.msra.mxu0 0.0
    %483 = vmatprep.subr.mxu0 0.0
    %484 = vmatpush1.xpose.msra.mxu0 0.0
    %485 = vmatprep.subr.mxu0 0.0
    %486 = vmatpush1.xpose.msra.mxu0 0.0
    %487 = vmatprep.subr.mxu0 0.0
    %488 = vmatpush1.xpose.msra.mxu0 0.0
    %489 = vmatprep.subr.mxu0 0.0
    %490 = vmatpush1.xpose.msra.mxu0 0.0
    %491 = vmatprep.subr.mxu0 0.0
    %492 = vmatpush1.xpose.msra.mxu0 0.0
    %493 = vmatprep.mubr.f32.mxu0 0.0
    %494 = vmatmul.mubr.f32.gmra.mrb[0].mxu0 %v423
    %v495 = vpop.f32.mrb[0].mxu0
    %v496 = vadd.f32 0.0, %v495
    %v497 = vpop.f32.mrb[0].mxu0
    %498 = vmatprep.mubr.f32.mxu0 0.0
    %499 = vmatmul.mubr.f32.gmra.mrb[0].mxu0 %v424
    %v500 = vpop.f32.mrb[0].mxu0
    %v501 = vadd.f32 0.0, %v500
    %v502 = vpop.f32.mrb[0].mxu0
    %503 = vdwg.mxu0
    %v504 = vmul.f32 %v496, 0.11111111
    %v505 = vmul.f32 %v501, 0.11111111
    %v506 = vadd.f32 %v320, %v504
    %v507 = vadd.f32 %v325, %v505
    %v508 = vmul.f32 %v423, 0.33333334
    %v509 = vmul.f32 %v424, 0.33333334
    %510 = vst [vmem:[#allocation7] sm:$0xff] %v508
    %511 = vst [vmem:[#allocation7 + $0x8] sm:$0xff] %v509
    %v512 = vmul.f32 %v425, 0.33333334
    %v513 = vmul.f32 %v426, 0.33333334
    %v514 = vmul.f32 %v427, 0.33333334
    %v515 = vmul.f32 %v428, 0.33333334
    %516 = vst [vmem:[#allocation8] sm:$0xff] %v512
    %517 = vst [vmem:[#allocation8 + $0x8] sm:$0xff] %v513
    %518 = vst [vmem:[#allocation8 + $0x10] sm:$0xff] %v514
    %519 = vst [vmem:[#allocation8 + $0x18] sm:$0xff] %v515
    %vm520 = vcmask 261120
    %521 = vst.msk [vmem:[#allocation10] sm:$0xff] %vm520, %v506
    %522 = vst.msk [vmem:[#allocation10 + $0x8] sm:$0xff] %vm520, %v507
    // Predicated region
    $region18: #{forward.1} parent=1 // pred_check
      _
    $region19: #{forward.1} parent=1 // pred_check_branch
      %524 = sbr.rel (0) target = $region21
    $region20: #{forward.1} parent=1 // pred_region
      %s526 = ssub.s32 256, 256
      %527 = vsyncadd [#allocation4], %s526
      %s528 = sshll.u32 [#allocation7], 4
      %s529 = int_to_ptr.vmem [resolvable:$true] %s528
      %534 = dma.vmem_to_hbm [thread:$0]  %s529, 256, %s2, [#allocation4], 128, 128, 8
    $region21: #{forward.1} parent=1 // pred_fallthru
      _
    // Predicated region
    $region22: #{forward.1} parent=1 // pred_check
      _
    $region23: #{forward.1} parent=1 // pred_check_branch
      %536 = sbr.rel (0) target = $region25
    $region24: #{forward.1} parent=1 // pred_region
      %s538 = ssub.s32 512, 512
      %539 = vsyncadd [#allocation9], %s538
      %s540 = sshll.u32 [#allocation8], 4
      %s541 = int_to_ptr.vmem [resolvable:$true] %s540
      %546 = dma.vmem_to_hbm [thread:$0]  %s541, 512, %s3, [#allocation9], 128, 128, 8
    $region25: #{forward.1} parent=1 // pred_fallthru
      _
    // Predicated region
    $region26: #{forward.1} parent=1 // pred_check
      _
    $region27: #{forward.1} parent=1 // pred_check_branch
      %548 = sbr.rel (0) target = $region29
    $region28: #{forward.1} parent=1 // pred_region
      %s550 = ssub.s32 256, 256
      %551 = vsyncadd [#allocation9], %s550
      %s552 = sshll.u32 [#allocation10], 4
      %s553 = int_to_ptr.vmem [resolvable:$true] %s552
      %558 = dma.vmem_to_hbm [thread:$0]  %s553, 256, %s4, [#allocation9], 128, 128, 8
    $region29: #{forward.1} parent=1 // pred_fallthru
      _
    // Predicated region
    $region30: #{forward.1} parent=1 // pred_check
      _
    $region31: #{forward.1} parent=1 // pred_check_branch
      %560 = sbr.rel (0) target = $region33
    $region32: #{forward.1} parent=1 // pred_region
      %561 = dma.done [#allocation4], 256
    $region33: #{forward.1} parent=1 // pred_fallthru
      _
    // Predicated region
    $region34: #{forward.1} parent=1 // pred_check
      _
    $region35: #{forward.1} parent=1 // pred_check_branch
      %563 = sbr.rel (0) target = $region37
    $region36: #{forward.1} parent=1 // pred_region
      %564 = dma.done [#allocation9], 512
    $region37: #{forward.1} parent=1 // pred_fallthru
      _
    // Predicated region
    $region38: #{forward.1} parent=1 // pred_check
      _
    $region39: #{forward.1} parent=1 // pred_check_branch
      %566 = sbr.rel (0) target = $region41
    $region40: #{forward.1} parent=1 // pred_region
      %567 = dma.done [#allocation9], 256
    $region41: #{forward.1} parent=1 // pred_fallthru
      _
    %568 = vsyncpa [#allocation3], 1
    %569 = vsyncpa [#allocation6], 1
    %570 = vsyncpa [#allocation4], 1
    %571 = vsyncpa [#allocation9], 1

</llo_original>
